<compile_context>
chip_gen: v7x
topology: tpu7x:2x2x1
jax: 0.10.0
libtpu: 0.0.40
codegen_flags: <defaults>
</compile_context>

<pallas_src>
import math
import time

import numpy as np

import jax
import jax.numpy as jnp
from jax.experimental import pallas as pl
from jax.experimental.pallas import tpu as pltpu


# ~2 MiB per live tile buffer: with double-buffered input + output that is
# ~8 MiB of scoped VMEM, safe on every TPU generation's default limit.
_TILE_BYTES_TARGET = 2 * 1024 * 1024
_LANE_CANDIDATES = (4096, 2048, 1024, 512, 256, 128)


def _identity_kernel(x_ref, o_ref):
    # Pure pass-through: copy the current VMEM tile to the output tile.
    o_ref[...] = x_ref[...]


def _choose_lane_width(total: int):
    """Largest lane-dense width (multiple of 128) dividing `total`.

    Prefers a width that still leaves >= 8 rows so the row axis can be tiled
    and pipelined; returns None if total is not a multiple of 128.
    """
    divisors = [L for L in _LANE_CANDIDATES if total % L == 0]
    if not divisors:
        return None
    for L in divisors:  # descending
        if total // L >= 8:
            return L
    return divisors[0]  # tiny arrays: widest lane, single block


def _choose_row_tile(rows: int, cols: int, itemsize: int) -> int:
    """Row-tile size: multiple of 8, divides rows, <= ~2 MiB per tile."""
    if rows % 8 != 0:
        # Full-extent block: the (8, 128) divisibility constraint is waived.
        return rows
    max_tr = max(8, (_TILE_BYTES_TARGET // (cols * itemsize)) // 8 * 8)
    tr = min(rows, max_tr)
    while rows % tr != 0:  # tr is a multiple of 8 and rows % 8 == 0 -> terminates
        tr -= 8
    return tr


@jax.jit
def _identity_forward(x: jax.Array) -> jax.Array:
    """Identity of x routed through a tiled, pipelined Pallas copy kernel."""
    total = math.prod(x.shape)
    itemsize = jnp.dtype(x.dtype).itemsize

    lane = _choose_lane_width(total)
    if lane is None:
        # Element count not a multiple of 128: a copy kernel would only add
        # masked-store HBM traffic, so elide it (review-recommended path).
        # TODO(synk): no lane-dense Pallas layout exists for this size.
        return x

    rows = total // lane
    tr = _choose_row_tile(rows, lane, itemsize)
    grid = rows // tr
    nbytes = rows * lane * itemsize

    x2d = x.reshape(rows, lane)  # free layout plumbing inside jit

    y2d = pl.pallas_call(
        _identity_kernel,
        out_shape=jax.ShapeDtypeStruct((rows, lane), x.dtype),
        grid_spec=pltpu.PrefetchScalarGridSpec(
            num_scalar_prefetch=0,
            grid=(grid,),
            in_specs=[pl.BlockSpec((tr, lane), lambda i: (i, 0))],
            out_specs=pl.BlockSpec((tr, lane), lambda i: (i, 0)),
        ),
        compiler_params=pltpu.CompilerParams(
            # >1 step: "parallel" lets v7x shard the copy across both
            # TensorCores; harmless on single-TC v5e/v6e.
            dimension_semantics=(("parallel",) if grid > 1 else ("arbitrary",)),
        ),
        # Pure memory op: read + write of the slab.
        cost_estimate=pl.CostEstimate(
            flops=0, transcendentals=0, bytes_accessed=2 * nbytes
        ),
        # Let XLA alias the output HBM buffer onto the input when the input
        # is dead after this call (halves HBM traffic in that case).
        input_output_aliases={0: 0},
    )(x2d)

    return y2d.reshape(x.shape)


class DummyModel:
    """JAX/Pallas port of the PyTorch DummyModel."""

    def __init__(self, name: str, mean: float, std: float, seed: int = 12345):
        self.name = name
        self.mean = mean
        self.std = std
        self.rng = np.random.default_rng(seed)

    def forward(self, x: jax.Array) -> jax.Array:
        # Host-side simulated latency, matching the PyTorch module.
        # TODO(synk): time.sleep / logging are host wall-clock side effects
        # with no Pallas equivalent; kept on the host.
        duration = float(self.rng.normal(loc=self.mean, scale=self.std))
        print(f"Sleep for {duration:.2f}sec")
        time.sleep(max(duration, 0.0))

        # Identity pass-through of x via the jit-cached Pallas copy kernel.
        return _identity_forward(x)

    __call__ = forward


if __name__ == "__main__":
    key = jax.random.PRNGKey(0)
    # Small NCHW input consistent with a generic tensor forward.
    x = jax.random.normal(key, (2, 4, 16, 16), dtype=jnp.float32)

    # Tiny mean / zero std so the demo does not actually stall.
    model = DummyModel(name="dummy", mean=0.01, std=0.0, seed=12345)

    y = model(x)
    y = jax.block_until_ready(y)

    assert y.shape == x.shape
    assert y.dtype == x.dtype
    np.testing.assert_array_equal(np.asarray(y), np.asarray(x))

    print("KERNEL_OK")
</pallas_src>

<mosaic_0001>
module attributes {stable_mosaic.version = 11 : i64} {
  func.func @_identity_kernel(%arg0: i32, %arg1: memref<8x256xf32, #tpu.memory_space<vmem>>, %arg2: memref<8x256xf32, #tpu.memory_space<vmem>>) attributes {dimension_semantics = [#tpu.dimension_semantics<arbitrary>], iteration_bounds = array<i64: 1>, scalar_prefetch = 0 : i64, scratch_operands = 0 : i64, tpu.core_type = #tpu.core_type<tc>, window_params = [{transform_indices = @transform_0, window_bounds = array<i64: 8, 256>}, {transform_indices = @transform_1, window_bounds = array<i64: 8, 256>}]} {
    %c0 = arith.constant 0 : index
    %c0_0 = arith.constant 0 : index
    %0 = vector.load %arg1[%c0, %c0_0] : memref<8x256xf32, #tpu.memory_space<vmem>>, vector<8x256xf32>
    %c0_1 = arith.constant 0 : index
    %c0_2 = arith.constant 0 : index
    %1 = vector.load %arg2[%c0_1, %c0_2] : memref<8x256xf32, #tpu.memory_space<vmem>>, vector<8x256xf32>
    tpu.vector_store %arg2[%c0_1, %c0_2], %0 {strides = array<i32>} : memref<8x256xf32, #tpu.memory_space<vmem>>, vector<8x256xf32>,
    return
  }
  func.func @transform_0(%arg0: i32) -> (i32, i32) {
    %c0_i32 = arith.constant 0 : i32
    %c0_i32_0 = arith.constant 0 : i32
    return %arg0, %c0_i32 : i32, i32
  }
  func.func @transform_1(%arg0: i32) -> (i32, i32) {
    %c0_i32 = arith.constant 0 : i32
    %c0_i32_0 = arith.constant 0 : i32
    return %arg0, %c0_i32 : i32, i32
  }
}

</mosaic_0001>

<llo_original>
// kernel: _identity_forward.1
$region0: #{_identity_forward.1}
  #allocation0 [shape = 'u32[]', space=smem, size = 0x4, offset = 0x4, fixed_abs, tag = 'smem constant byte address 0x4 - core index']
  #allocation1 [shape = 'u32[144,128]{1,0:T(1,128)}', space=vmem, size = 0x12000, scoped, tag = 'internal scratch']
  %s0 = inlined_call_operand.vmem [shape: f32[8,256], index: 0, kind: input, shape index: {}, may-alias: {0,1}]
  %s1 = inlined_call_operand.vmem [shape: f32[8,256], index: 1, kind: output, shape index: {}, may-alias: {0,1}]
  %s2 = sld [smem:[#allocation0]]
  $region14: #{_identity_forward.1} parent=0
    _
  %s4 = ssub.s32 1, %s2
  %s5 = scalar_select 0, %s4, %s2
  // Predicated region
  $region2: #{_identity_forward.1} parent=0 // pred_check
    _
  $region3: #{_identity_forward.1} parent=0 // pred_check_branch
    %7 = sbr.rel (0) target = $region5
  $region4: #{_identity_forward.1} parent=0 // pred_region
    _
  $region5: #{_identity_forward.1} parent=0 // pred_fallthru
    _
  %v8 = vld [vmem:[%s0] sm:$0xff]
  %v9 = vld [vmem:[%s0 + $0x8] sm:$0xff]
  %10 = vst [vmem:[%s1] sm:$0xff] %v8
  %11 = vst [vmem:[%s1 + $0x8] sm:$0xff] %v9
  // Predicated region
  $region6: #{_identity_forward.1} parent=0 // pred_check
    _
  $region7: #{_identity_forward.1} parent=0 // pred_check_branch
    %13 = sbr.rel (0) target = $region9
  $region8: #{_identity_forward.1} parent=0 // pred_region
    _
  $region9: #{_identity_forward.1} parent=0 // pred_fallthru
    _
  // Predicated region
  $region10: #{_identity_forward.1} parent=0 // pred_check
    _
  $region11: #{_identity_forward.1} parent=0 // pred_check_branch
    %15 = sbr.rel (0) target = $region13
  $region12: #{_identity_forward.1} parent=0 // pred_region
    _
  $region13: #{_identity_forward.1} parent=0 // pred_fallthru
    _

</llo_original>
